<compile_context>
chip_gen: v7x
topology: tpu7x:2x2x1
jax: 0.10.0
libtpu: 0.0.40
codegen_flags: <defaults>
</compile_context>

<pallas_src>
import functools

import jax
import jax.numpy as jnp
from jax.experimental import pallas as pl
from jax.experimental.pallas import tpu as pltpu


# ----------------------------- DDPM schedules ------------------------------
def ddpm_schedules(beta1, beta2, T):
    assert beta1 < beta2 < 1.0, "beta1 and beta2 must be in (0, 1)"
    beta_t = (beta2 - beta1) * jnp.arange(0, T + 1, dtype=jnp.float32) / T + beta1
    sqrt_beta_t = jnp.sqrt(beta_t)
    alpha_t = 1.0 - beta_t
    log_alpha_t = jnp.log(alpha_t)
    alphabar_t = jnp.exp(jnp.cumsum(log_alpha_t))
    sqrtab = jnp.sqrt(alphabar_t)
    oneover_sqrta = 1.0 / jnp.sqrt(alpha_t)
    sqrtmab = jnp.sqrt(1.0 - alphabar_t)
    mab_over_sqrtmab_inv = (1.0 - alpha_t) / sqrtmab
    return {
        "alpha_t": alpha_t,
        "oneover_sqrta": oneover_sqrta,
        "sqrt_beta_t": sqrt_beta_t,
        "alphabar_t": alphabar_t,
        "sqrtab": sqrtab,
        "sqrtmab": sqrtmab,
        "mab_over_sqrtmab": mab_over_sqrtmab_inv,
    }


# ------------------------------ Pallas kernel -------------------------------
def _ddpm_loss_kernel(B, C, inv_total,
                      sa_ref, sb_ref, tfrac_ref, mask_ref,   # SMEM (B,)
                      w_ref, wt_ref, bt_ref, emb_ref,        # SMEM (C*C,), (C,), (C,), (B*C,)
                      x_ref, noise_ref,                      # VMEM (B*C, N) lane-dense
                      loss_ref):                             # SMEM (1,)
    # Single grid step: everything is unrolled over the tiny B and C dims,
    # each row is a lane-dense (1, N) VPU vector op.
    acc = None
    for b in range(B):
        sa = sa_ref[b]
        sb = sb_ref[b]
        tf = tfrac_ref[b]
        keep = 1.0 - mask_ref[b]

        # load the per-sample rows once (ref-level static slices -> plain vld)
        n_rows = [noise_ref[pl.ds(b * C + k, 1), :] for k in range(C)]
        xt_rows = [sa * x_ref[pl.ds(b * C + k, 1), :] + sb * n_rows[k]
                   for k in range(C)]

        for d in range(C):
            # per-channel scalar bias: t*w_t + b_t + (1-mask)*class_emb[c]
            bias = tf * wt_ref[d] + bt_ref[d] + keep * emb_ref[b * C + d]
            # 4x4 channel mix on the VPU: eps_d = sum_k w[k, d] * x_t_k + bias
            e = xt_rows[0] * w_ref[0 * C + d]
            for k in range(1, C):
                e = e + xt_rows[k] * w_ref[k * C + d]
            diff = n_rows[d] - (e + bias)
            sq = diff * diff
            acc = sq if acc is None else acc + sq

    loss_ref[0] = jnp.sum(acc) * inv_total


# ------------------------------ JAX wrapper ---------------------------------
def init_params(key, n_classes=10, n_feat=4):
    k1, k2, k3, k4 = jax.random.split(key, 4)
    return {
        "w_mix": jax.random.normal(k1, (n_feat, n_feat), jnp.float32)
        / jnp.sqrt(n_feat),
        "w_t": 0.1 * jax.random.normal(k2, (1, n_feat), jnp.float32),
        "b_t": 0.1 * jax.random.normal(k3, (1, n_feat), jnp.float32),
        "class_emb": 0.1 * jax.random.normal(k4, (n_classes, n_feat), jnp.float32),
    }


def ddpm_forward(params, sched, x, c, key, n_T, drop_prob=0.1):
    """DDPM.forward: samples t and noise, builds x_t, runs eps-model, MSE loss."""
    B, C, H, W = x.shape
    N = H * W
    k_t, k_n, k_m = jax.random.split(key, 3)

    ts = jax.random.randint(k_t, (B,), 1, n_T + 1)                        # _ts
    noise = jax.random.normal(k_n, x.shape, jnp.float32)                  # noise
    mask = jax.random.bernoulli(k_m, drop_prob, c.shape).astype(jnp.float32)

    sa = sched["sqrtab"][ts].astype(jnp.float32)        # (B,)
    sb = sched["sqrtmab"][ts].astype(jnp.float32)       # (B,)
    tfrac = ts.astype(jnp.float32) / n_T                # _ts / n_T
    emb_sel = params["class_emb"][c].reshape(-1)        # (B*C,) class-emb gather (glue)

    # channels-first layout, free view: NCHW -> (B*C, H*W) with N on lanes
    x_r = x.reshape(B * C, N)
    n_r = noise.reshape(B * C, N)
    w_flat = params["w_mix"].reshape(-1)                # row-major: w[k*C + d] = w_mix[k, d]
    wt = params["w_t"].reshape(-1)
    bt = params["b_t"].reshape(-1)

    smem = pl.BlockSpec(memory_space=pltpu.MemorySpace.SMEM)
    vmem = pl.BlockSpec(memory_space=pltpu.MemorySpace.VMEM)
    kernel = functools.partial(_ddpm_loss_kernel, B, C, 1.0 / float(B * N * C))

    # Single invocation (no grid): total live VMEM is ~16 KiB, far under the
    # scoped limit on v5e/v6e/v7x. At real ContextUnet sizes this would need an
    # N-tiled grid (tile_n multiple of 8) and an explicit vmem_limit_bytes, plus
    # a 'parallel' batch axis with per-program partial sums for v7x's 2 TCs.
    loss = pl.pallas_call(
        kernel,
        out_shape=jax.ShapeDtypeStruct((1,), jnp.float32),
        in_specs=[smem, smem, smem, smem,          # sa, sb, tfrac, mask
                  smem, smem, smem, smem,          # w_mix, w_t, b_t, emb_sel
                  vmem, vmem],                     # x rows, noise rows
        out_specs=smem,
    )(sa, sb, tfrac, mask, w_flat, wt, bt, emb_sel, x_r, n_r)

    return loss[0], (ts, noise, mask)


def ddpm_forward_ref(params, sched, x, c, ts, noise, mask, n_T):
    """Pure-JAX reference with the same sampled (ts, noise, mask)."""
    B, C, H, W = x.shape
    sa = sched["sqrtab"][ts][:, None, None, None]
    sb = sched["sqrtmab"][ts][:, None, None, None]
    x_t = sa * x + sb * noise
    x_r = jnp.transpose(x_t, (0, 2, 3, 1)).reshape(B, H * W, C)
    n_r = jnp.transpose(noise, (0, 2, 3, 1)).reshape(B, H * W, C)
    bias = ((ts.astype(jnp.float32) / n_T)[:, None] * params["w_t"]
            + params["b_t"]
            + (1.0 - mask)[:, None] * params["class_emb"][c])
    eps = jnp.einsum("bnc,cd->bnd", x_r, params["w_mix"]) + bias[:, None, :]
    return jnp.mean((n_r - eps) ** 2)


# ---------------------------------- main -------------------------------------
if __name__ == "__main__":
    key = jax.random.PRNGKey(0)
    k_par, k_x, k_c, k_fwd = jax.random.split(key, 4)

    B, C, H, W = 2, 4, 16, 16
    n_T = 400
    betas = (1e-4, 0.02)
    drop_prob = 0.1

    sched = ddpm_schedules(betas[0], betas[1], n_T)
    params = init_params(k_par, n_classes=10, n_feat=C)

    x = jax.random.normal(k_x, (B, C, H, W), jnp.float32)
    c = jax.random.randint(k_c, (B,), 0, 10)

    loss, (ts, noise, mask) = ddpm_forward(params, sched, x, c, k_fwd, n_T, drop_prob)
    loss = jax.block_until_ready(loss)

    loss_ref = ddpm_forward_ref(params, sched, x, c, ts, noise, mask, n_T)
    assert jnp.allclose(loss, loss_ref, rtol=1e-5, atol=1e-5), (loss, loss_ref)

    # TODO(synk): the PyTorch nn_model is an externally injected module (e.g.
    # ContextUnet); here it is a deterministic synthetic 1x1-conv eps-predictor.
    print("KERNEL_OK")
</pallas_src>

<mosaic_0001>
module attributes {stable_mosaic.version = 11 : i64} {
  func.func @_ddpm_loss_kernel(%arg0: memref<2xf32, #tpu.memory_space<smem>>, %arg1: memref<2xf32, #tpu.memory_space<smem>>, %arg2: memref<2xf32, #tpu.memory_space<smem>>, %arg3: memref<2xf32, #tpu.memory_space<smem>>, %arg4: memref<16xf32, #tpu.memory_space<smem>>, %arg5: memref<4xf32, #tpu.memory_space<smem>>, %arg6: memref<4xf32, #tpu.memory_space<smem>>, %arg7: memref<8xf32, #tpu.memory_space<smem>>, %arg8: memref<8x256xf32, #tpu.memory_space<vmem>>, %arg9: memref<8x256xf32, #tpu.memory_space<vmem>>, %arg10: memref<1xf32, #tpu.memory_space<smem>>) attributes {dimension_semantics = [], scalar_prefetch = 0 : i64, scratch_operands = 0 : i64, tpu.core_type = #tpu.core_type<tc>} {
    %c0 = arith.constant 0 : index
    %0 = memref.load %arg0[%c0] : memref<2xf32, #tpu.memory_space<smem>>
    %c0_0 = arith.constant 0 : index
    %1 = memref.load %arg1[%c0_0] : memref<2xf32, #tpu.memory_space<smem>>
    %c0_1 = arith.constant 0 : index
    %2 = memref.load %arg2[%c0_1] : memref<2xf32, #tpu.memory_space<smem>>
    %c0_2 = arith.constant 0 : index
    %3 = memref.load %arg3[%c0_2] : memref<2xf32, #tpu.memory_space<smem>>
    %cst = arith.constant 1.000000e+00 : f32
    %4 = arith.subf %cst, %3 : f32
    %c0_3 = arith.constant 0 : index
    %c0_4 = arith.constant 0 : index
    %5 = vector.load %arg9[%c0_3, %c0_4] : memref<8x256xf32, #tpu.memory_space<vmem>>, vector<1x256xf32>
    %c1 = arith.constant 1 : index
    %c0_5 = arith.constant 0 : index
    %6 = vector.load %arg9[%c1, %c0_5] : memref<8x256xf32, #tpu.memory_space<vmem>>, vector<1x256xf32>
    %c2 = arith.constant 2 : index
    %c0_6 = arith.constant 0 : index
    %7 = vector.load %arg9[%c2, %c0_6] : memref<8x256xf32, #tpu.memory_space<vmem>>, vector<1x256xf32>
    %c3 = arith.constant 3 : index
    %c0_7 = arith.constant 0 : index
    %8 = vector.load %arg9[%c3, %c0_7] : memref<8x256xf32, #tpu.memory_space<vmem>>, vector<1x256xf32>
    %c0_8 = arith.constant 0 : index
    %c0_9 = arith.constant 0 : index
    %9 = vector.load %arg8[%c0_8, %c0_9] : memref<8x256xf32, #tpu.memory_space<vmem>>, vector<1x256xf32>
    %10 = vector.broadcast %0 : f32 to vector<1x256xf32>
    %11 = arith.mulf %10, %9 : vector<1x256xf32>
    %12 = vector.broadcast %1 : f32 to vector<1x256xf32>
    %13 = arith.mulf %12, %5 : vector<1x256xf32>
    %14 = arith.addf %11, %13 : vector<1x256xf32>
    %c1_10 = arith.constant 1 : index
    %c0_11 = arith.constant 0 : index
    %15 = vector.load %arg8[%c1_10, %c0_11] : memref<8x256xf32, #tpu.memory_space<vmem>>, vector<1x256xf32>
    %16 = vector.broadcast %0 : f32 to vector<1x256xf32>
    %17 = arith.mulf %16, %15 : vector<1x256xf32>
    %18 = vector.broadcast %1 : f32 to vector<1x256xf32>
    %19 = arith.mulf %18, %6 : vector<1x256xf32>
    %20 = arith.addf %17, %19 : vector<1x256xf32>
    %c2_12 = arith.constant 2 : index
    %c0_13 = arith.constant 0 : index
    %21 = vector.load %arg8[%c2_12, %c0_13] : memref<8x256xf32, #tpu.memory_space<vmem>>, vector<1x256xf32>
    %22 = vector.broadcast %0 : f32 to vector<1x256xf32>
    %23 = arith.mulf %22, %21 : vector<1x256xf32>
    %24 = vector.broadcast %1 : f32 to vector<1x256xf32>
    %25 = arith.mulf %24, %7 : vector<1x256xf32>
    %26 = arith.addf %23, %25 : vector<1x256xf32>
    %c3_14 = arith.constant 3 : index
    %c0_15 = arith.constant 0 : index
    %27 = vector.load %arg8[%c3_14, %c0_15] : memref<8x256xf32, #tpu.memory_space<vmem>>, vector<1x256xf32>
    %28 = vector.broadcast %0 : f32 to vector<1x256xf32>
    %29 = arith.mulf %28, %27 : vector<1x256xf32>
    %30 = vector.broadcast %1 : f32 to vector<1x256xf32>
    %31 = arith.mulf %30, %8 : vector<1x256xf32>
    %32 = arith.addf %29, %31 : vector<1x256xf32>
    %c0_16 = arith.constant 0 : index
    %33 = memref.load %arg5[%c0_16] : memref<4xf32, #tpu.memory_space<smem>>
    %34 = arith.mulf %2, %33 : f32
    %c0_17 = arith.constant 0 : index
    %35 = memref.load %arg6[%c0_17] : memref<4xf32, #tpu.memory_space<smem>>
    %36 = arith.addf %34, %35 : f32
    %c0_18 = arith.constant 0 : index
    %37 = memref.load %arg7[%c0_18] : memref<8xf32, #tpu.memory_space<smem>>
    %38 = arith.mulf %4, %37 : f32
    %39 = arith.addf %36, %38 : f32
    %c0_19 = arith.constant 0 : index
    %40 = memref.load %arg4[%c0_19] : memref<16xf32, #tpu.memory_space<smem>>
    %41 = vector.broadcast %40 : f32 to vector<1x256xf32>
    %42 = arith.mulf %14, %41 : vector<1x256xf32>
    %c4 = arith.constant 4 : index
    %43 = memref.load %arg4[%c4] : memref<16xf32, #tpu.memory_space<smem>>
    %44 = vector.broadcast %43 : f32 to vector<1x256xf32>
    %45 = arith.mulf %20, %44 : vector<1x256xf32>
    %46 = arith.addf %42, %45 : vector<1x256xf32>
    %c8 = arith.constant 8 : index
    %47 = memref.load %arg4[%c8] : memref<16xf32, #tpu.memory_space<smem>>
    %48 = vector.broadcast %47 : f32 to vector<1x256xf32>
    %49 = arith.mulf %26, %48 : vector<1x256xf32>
    %50 = arith.addf %46, %49 : vector<1x256xf32>
    %c12 = arith.constant 12 : index
    %51 = memref.load %arg4[%c12] : memref<16xf32, #tpu.memory_space<smem>>
    %52 = vector.broadcast %51 : f32 to vector<1x256xf32>
    %53 = arith.mulf %32, %52 : vector<1x256xf32>
    %54 = arith.addf %50, %53 : vector<1x256xf32>
    %55 = vector.broadcast %39 : f32 to vector<1x256xf32>
    %56 = arith.addf %54, %55 : vector<1x256xf32>
    %57 = arith.subf %5, %56 : vector<1x256xf32>
    %58 = arith.mulf %57, %57 : vector<1x256xf32>
    %c1_20 = arith.constant 1 : index
    %59 = memref.load %arg5[%c1_20] : memref<4xf32, #tpu.memory_space<smem>>
    %60 = arith.mulf %2, %59 : f32
    %c1_21 = arith.constant 1 : index
    %61 = memref.load %arg6[%c1_21] : memref<4xf32, #tpu.memory_space<smem>>
    %62 = arith.addf %60, %61 : f32
    %c1_22 = arith.constant 1 : index
    %63 = memref.load %arg7[%c1_22] : memref<8xf32, #tpu.memory_space<smem>>
    %64 = arith.mulf %4, %63 : f32
    %65 = arith.addf %62, %64 : f32
    %c1_23 = arith.constant 1 : index
    %66 = memref.load %arg4[%c1_23] : memref<16xf32, #tpu.memory_space<smem>>
    %67 = vector.broadcast %66 : f32 to vector<1x256xf32>
    %68 = arith.mulf %14, %67 : vector<1x256xf32>
    %c5 = arith.constant 5 : index
    %69 = memref.load %arg4[%c5] : memref<16xf32, #tpu.memory_space<smem>>
    %70 = vector.broadcast %69 : f32 to vector<1x256xf32>
    %71 = arith.mulf %20, %70 : vector<1x256xf32>
    %72 = arith.addf %68, %71 : vector<1x256xf32>
    %c9 = arith.constant 9 : index
    %73 = memref.load %arg4[%c9] : memref<16xf32, #tpu.memory_space<smem>>
    %74 = vector.broadcast %73 : f32 to vector<1x256xf32>
    %75 = arith.mulf %26, %74 : vector<1x256xf32>
    %76 = arith.addf %72, %75 : vector<1x256xf32>
    %c13 = arith.constant 13 : index
    %77 = memref.load %arg4[%c13] : memref<16xf32, #tpu.memory_space<smem>>
    %78 = vector.broadcast %77 : f32 to vector<1x256xf32>
    %79 = arith.mulf %32, %78 : vector<1x256xf32>
    %80 = arith.addf %76, %79 : vector<1x256xf32>
    %81 = vector.broadcast %65 : f32 to vector<1x256xf32>
    %82 = arith.addf %80, %81 : vector<1x256xf32>
    %83 = arith.subf %6, %82 : vector<1x256xf32>
    %84 = arith.mulf %83, %83 : vector<1x256xf32>
    %85 = arith.addf %58, %84 : vector<1x256xf32>
    %c2_24 = arith.constant 2 : index
    %86 = memref.load %arg5[%c2_24] : memref<4xf32, #tpu.memory_space<smem>>
    %87 = arith.mulf %2, %86 : f32
    %c2_25 = arith.constant 2 : index
    %88 = memref.load %arg6[%c2_25] : memref<4xf32, #tpu.memory_space<smem>>
    %89 = arith.addf %87, %88 : f32
    %c2_26 = arith.constant 2 : index
    %90 = memref.load %arg7[%c2_26] : memref<8xf32, #tpu.memory_space<smem>>
    %91 = arith.mulf %4, %90 : f32
    %92 = arith.addf %89, %91 : f32
    %c2_27 = arith.constant 2 : index
    %93 = memref.load %arg4[%c2_27] : memref<16xf32, #tpu.memory_space<smem>>
    %94 = vector.broadcast %93 : f32 to vector<1x256xf32>
    %95 = arith.mulf %14, %94 : vector<1x256xf32>
    %c6 = arith.constant 6 : index
    %96 = memref.load %arg4[%c6] : memref<16xf32, #tpu.memory_space<smem>>
    %97 = vector.broadcast %96 : f32 to vector<1x256xf32>
    %98 = arith.mulf %20, %97 : vector<1x256xf32>
    %99 = arith.addf %95, %98 : vector<1x256xf32>
    %c10 = arith.constant 10 : index
    %100 = memref.load %arg4[%c10] : memref<16xf32, #tpu.memory_space<smem>>
    %101 = vector.broadcast %100 : f32 to vector<1x256xf32>
    %102 = arith.mulf %26, %101 : vector<1x256xf32>
    %103 = arith.addf %99, %102 : vector<1x256xf32>
    %c14 = arith.constant 14 : index
    %104 = memref.load %arg4[%c14] : memref<16xf32, #tpu.memory_space<smem>>
    %105 = vector.broadcast %104 : f32 to vector<1x256xf32>
    %106 = arith.mulf %32, %105 : vector<1x256xf32>
    %107 = arith.addf %103, %106 : vector<1x256xf32>
    %108 = vector.broadcast %92 : f32 to vector<1x256xf32>
    %109 = arith.addf %107, %108 : vector<1x256xf32>
    %110 = arith.subf %7, %109 : vector<1x256xf32>
    %111 = arith.mulf %110, %110 : vector<1x256xf32>
    %112 = arith.addf %85, %111 : vector<1x256xf32>
    %c3_28 = arith.constant 3 : index
    %113 = memref.load %arg5[%c3_28] : memref<4xf32, #tpu.memory_space<smem>>
    %114 = arith.mulf %2, %113 : f32
    %c3_29 = arith.constant 3 : index
    %115 = memref.load %arg6[%c3_29] : memref<4xf32, #tpu.memory_space<smem>>
    %116 = arith.addf %114, %115 : f32
    %c3_30 = arith.constant 3 : index
    %117 = memref.load %arg7[%c3_30] : memref<8xf32, #tpu.memory_space<smem>>
    %118 = arith.mulf %4, %117 : f32
    %119 = arith.addf %116, %118 : f32
    %c3_31 = arith.constant 3 : index
    %120 = memref.load %arg4[%c3_31] : memref<16xf32, #tpu.memory_space<smem>>
    %121 = vector.broadcast %120 : f32 to vector<1x256xf32>
    %122 = arith.mulf %14, %121 : vector<1x256xf32>
    %c7 = arith.constant 7 : index
    %123 = memref.load %arg4[%c7] : memref<16xf32, #tpu.memory_space<smem>>
    %124 = vector.broadcast %123 : f32 to vector<1x256xf32>
    %125 = arith.mulf %20, %124 : vector<1x256xf32>
    %126 = arith.addf %122, %125 : vector<1x256xf32>
    %c11 = arith.constant 11 : index
    %127 = memref.load %arg4[%c11] : memref<16xf32, #tpu.memory_space<smem>>
    %128 = vector.broadcast %127 : f32 to vector<1x256xf32>
    %129 = arith.mulf %26, %128 : vector<1x256xf32>
    %130 = arith.addf %126, %129 : vector<1x256xf32>
    %c15 = arith.constant 15 : index
    %131 = memref.load %arg4[%c15] : memref<16xf32, #tpu.memory_space<smem>>
    %132 = vector.broadcast %131 : f32 to vector<1x256xf32>
    %133 = arith.mulf %32, %132 : vector<1x256xf32>
    %134 = arith.addf %130, %133 : vector<1x256xf32>
    %135 = vector.broadcast %119 : f32 to vector<1x256xf32>
    %136 = arith.addf %134, %135 : vector<1x256xf32>
    %137 = arith.subf %8, %136 : vector<1x256xf32>
    %138 = arith.mulf %137, %137 : vector<1x256xf32>
    %139 = arith.addf %112, %138 : vector<1x256xf32>
    %c1_32 = arith.constant 1 : index
    %140 = memref.load %arg0[%c1_32] : memref<2xf32, #tpu.memory_space<smem>>
    %c1_33 = arith.constant 1 : index
    %141 = memref.load %arg1[%c1_33] : memref<2xf32, #tpu.memory_space<smem>>
    %c1_34 = arith.constant 1 : index
    %142 = memref.load %arg2[%c1_34] : memref<2xf32, #tpu.memory_space<smem>>
    %c1_35 = arith.constant 1 : index
    %143 = memref.load %arg3[%c1_35] : memref<2xf32, #tpu.memory_space<smem>>
    %cst_36 = arith.constant 1.000000e+00 : f32
    %144 = arith.subf %cst_36, %143 : f32
    %c4_37 = arith.constant 4 : index
    %c0_38 = arith.constant 0 : index
    %145 = vector.load %arg9[%c4_37, %c0_38] : memref<8x256xf32, #tpu.memory_space<vmem>>, vector<1x256xf32>
    %c5_39 = arith.constant 5 : index
    %c0_40 = arith.constant 0 : index
    %146 = vector.load %arg9[%c5_39, %c0_40] : memref<8x256xf32, #tpu.memory_space<vmem>>, vector<1x256xf32>
    %c6_41 = arith.constant 6 : index
    %c0_42 = arith.constant 0 : index
    %147 = vector.load %arg9[%c6_41, %c0_42] : memref<8x256xf32, #tpu.memory_space<vmem>>, vector<1x256xf32>
    %c7_43 = arith.constant 7 : index
    %c0_44 = arith.constant 0 : index
    %148 = vector.load %arg9[%c7_43, %c0_44] : memref<8x256xf32, #tpu.memory_space<vmem>>, vector<1x256xf32>
    %c4_45 = arith.constant 4 : index
    %c0_46 = arith.constant 0 : index
    %149 = vector.load %arg8[%c4_45, %c0_46] : memref<8x256xf32, #tpu.memory_space<vmem>>, vector<1x256xf32>
    %150 = vector.broadcast %140 : f32 to vector<1x256xf32>
    %151 = arith.mulf %150, %149 : vector<1x256xf32>
    %152 = vector.broadcast %141 : f32 to vector<1x256xf32>
    %153 = arith.mulf %152, %145 : vector<1x256xf32>
    %154 = arith.addf %151, %153 : vector<1x256xf32>
    %c5_47 = arith.constant 5 : index
    %c0_48 = arith.constant 0 : index
    %155 = vector.load %arg8[%c5_47, %c0_48] : memref<8x256xf32, #tpu.memory_space<vmem>>, vector<1x256xf32>
    %156 = vector.broadcast %140 : f32 to vector<1x256xf32>
    %157 = arith.mulf %156, %155 : vector<1x256xf32>
    %158 = vector.broadcast %141 : f32 to vector<1x256xf32>
    %159 = arith.mulf %158, %146 : vector<1x256xf32>
    %160 = arith.addf %157, %159 : vector<1x256xf32>
    %c6_49 = arith.constant 6 : index
    %c0_50 = arith.constant 0 : index
    %161 = vector.load %arg8[%c6_49, %c0_50] : memref<8x256xf32, #tpu.memory_space<vmem>>, vector<1x256xf32>
    %162 = vector.broadcast %140 : f32 to vector<1x256xf32>
    %163 = arith.mulf %162, %161 : vector<1x256xf32>
    %164 = vector.broadcast %141 : f32 to vector<1x256xf32>
    %165 = arith.mulf %164, %147 : vector<1x256xf32>
    %166 = arith.addf %163, %165 : vector<1x256xf32>
    %c7_51 = arith.constant 7 : index
    %c0_52 = arith.constant 0 : index
    %167 = vector.load %arg8[%c7_51, %c0_52] : memref<8x256xf32, #tpu.memory_space<vmem>>, vector<1x256xf32>
    %168 = vector.broadcast %140 : f32 to vector<1x256xf32>
    %169 = arith.mulf %168, %167 : vector<1x256xf32>
    %170 = vector.broadcast %141 : f32 to vector<1x256xf32>
    %171 = arith.mulf %170, %148 : vector<1x256xf32>
    %172 = arith.addf %169, %171 : vector<1x256xf32>
    %c0_53 = arith.constant 0 : index
    %173 = memref.load %arg5[%c0_53] : memref<4xf32, #tpu.memory_space<smem>>
    %174 = arith.mulf %142, %173 : f32
    %c0_54 = arith.constant 0 : index
    %175 = memref.load %arg6[%c0_54] : memref<4xf32, #tpu.memory_space<smem>>
    %176 = arith.addf %174, %175 : f32
    %c4_55 = arith.constant 4 : index
    %177 = memref.load %arg7[%c4_55] : memref<8xf32, #tpu.memory_space<smem>>
    %178 = arith.mulf %144, %177 : f32
    %179 = arith.addf %176, %178 : f32
    %c0_56 = arith.constant 0 : index
    %180 = memref.load %arg4[%c0_56] : memref<16xf32, #tpu.memory_space<smem>>
    %181 = vector.broadcast %180 : f32 to vector<1x256xf32>
    %182 = arith.mulf %154, %181 : vector<1x256xf32>
    %c4_57 = arith.constant 4 : index
    %183 = memref.load %arg4[%c4_57] : memref<16xf32, #tpu.memory_space<smem>>
    %184 = vector.broadcast %183 : f32 to vector<1x256xf32>
    %185 = arith.mulf %160, %184 : vector<1x256xf32>
    %186 = arith.addf %182, %185 : vector<1x256xf32>
    %c8_58 = arith.constant 8 : index
    %187 = memref.load %arg4[%c8_58] : memref<16xf32, #tpu.memory_space<smem>>
    %188 = vector.broadcast %187 : f32 to vector<1x256xf32>
    %189 = arith.mulf %166, %188 : vector<1x256xf32>
    %190 = arith.addf %186, %189 : vector<1x256xf32>
    %c12_59 = arith.constant 12 : index
    %191 = memref.load %arg4[%c12_59] : memref<16xf32, #tpu.memory_space<smem>>
    %192 = vector.broadcast %191 : f32 to vector<1x256xf32>
    %193 = arith.mulf %172, %192 : vector<1x256xf32>
    %194 = arith.addf %190, %193 : vector<1x256xf32>
    %195 = vector.broadcast %179 : f32 to vector<1x256xf32>
    %196 = arith.addf %194, %195 : vector<1x256xf32>
    %197 = arith.subf %145, %196 : vector<1x256xf32>
    %198 = arith.mulf %197, %197 : vector<1x256xf32>
    %199 = arith.addf %139, %198 : vector<1x256xf32>
    %c1_60 = arith.constant 1 : index
    %200 = memref.load %arg5[%c1_60] : memref<4xf32, #tpu.memory_space<smem>>
    %201 = arith.mulf %142, %200 : f32
    %c1_61 = arith.constant 1 : index
    %202 = memref.load %arg6[%c1_61] : memref<4xf32, #tpu.memory_space<smem>>
    %203 = arith.addf %201, %202 : f32
    %c5_62 = arith.constant 5 : index
    %204 = memref.load %arg7[%c5_62] : memref<8xf32, #tpu.memory_space<smem>>
    %205 = arith.mulf %144, %204 : f32
    %206 = arith.addf %203, %205 : f32
    %c1_63 = arith.constant 1 : index
    %207 = memref.load %arg4[%c1_63] : memref<16xf32, #tpu.memory_space<smem>>
    %208 = vector.broadcast %207 : f32 to vector<1x256xf32>
    %209 = arith.mulf %154, %208 : vector<1x256xf32>
    %c5_64 = arith.constant 5 : index
    %210 = memref.load %arg4[%c5_64] : memref<16xf32, #tpu.memory_space<smem>>
    %211 = vector.broadcast %210 : f32 to vector<1x256xf32>
    %212 = arith.mulf %160, %211 : vector<1x256xf32>
    %213 = arith.addf %209, %212 : vector<1x256xf32>
    %c9_65 = arith.constant 9 : index
    %214 = memref.load %arg4[%c9_65] : memref<16xf32, #tpu.memory_space<smem>>
    %215 = vector.broadcast %214 : f32 to vector<1x256xf32>
    %216 = arith.mulf %166, %215 : vector<1x256xf32>
    %217 = arith.addf %213, %216 : vector<1x256xf32>
    %c13_66 = arith.constant 13 : index
    %218 = memref.load %arg4[%c13_66] : memref<16xf32, #tpu.memory_space<smem>>
    %219 = vector.broadcast %218 : f32 to vector<1x256xf32>
    %220 = arith.mulf %172, %219 : vector<1x256xf32>
    %221 = arith.addf %217, %220 : vector<1x256xf32>
    %222 = vector.broadcast %206 : f32 to vector<1x256xf32>
    %223 = arith.addf %221, %222 : vector<1x256xf32>
    %224 = arith.subf %146, %223 : vector<1x256xf32>
    %225 = arith.mulf %224, %224 : vector<1x256xf32>
    %226 = arith.addf %199, %225 : vector<1x256xf32>
    %c2_67 = arith.constant 2 : index
    %227 = memref.load %arg5[%c2_67] : memref<4xf32, #tpu.memory_space<smem>>
    %228 = arith.mulf %142, %227 : f32
    %c2_68 = arith.constant 2 : index
    %229 = memref.load %arg6[%c2_68] : memref<4xf32, #tpu.memory_space<smem>>
    %230 = arith.addf %228, %229 : f32
    %c6_69 = arith.constant 6 : index
    %231 = memref.load %arg7[%c6_69] : memref<8xf32, #tpu.memory_space<smem>>
    %232 = arith.mulf %144, %231 : f32
    %233 = arith.addf %230, %232 : f32
    %c2_70 = arith.constant 2 : index
    %234 = memref.load %arg4[%c2_70] : memref<16xf32, #tpu.memory_space<smem>>
    %235 = vector.broadcast %234 : f32 to vector<1x256xf32>
    %236 = arith.mulf %154, %235 : vector<1x256xf32>
    %c6_71 = arith.constant 6 : index
    %237 = memref.load %arg4[%c6_71] : memref<16xf32, #tpu.memory_space<smem>>
    %238 = vector.broadcast %237 : f32 to vector<1x256xf32>
    %239 = arith.mulf %160, %238 : vector<1x256xf32>
    %240 = arith.addf %236, %239 : vector<1x256xf32>
    %c10_72 = arith.constant 10 : index
    %241 = memref.load %arg4[%c10_72] : memref<16xf32, #tpu.memory_space<smem>>
    %242 = vector.broadcast %241 : f32 to vector<1x256xf32>
    %243 = arith.mulf %166, %242 : vector<1x256xf32>
    %244 = arith.addf %240, %243 : vector<1x256xf32>
    %c14_73 = arith.constant 14 : index
    %245 = memref.load %arg4[%c14_73] : memref<16xf32, #tpu.memory_space<smem>>
    %246 = vector.broadcast %245 : f32 to vector<1x256xf32>
    %247 = arith.mulf %172, %246 : vector<1x256xf32>
    %248 = arith.addf %244, %247 : vector<1x256xf32>
    %249 = vector.broadcast %233 : f32 to vector<1x256xf32>
    %250 = arith.addf %248, %249 : vector<1x256xf32>
    %251 = arith.subf %147, %250 : vector<1x256xf32>
    %252 = arith.mulf %251, %251 : vector<1x256xf32>
    %253 = arith.addf %226, %252 : vector<1x256xf32>
    %c3_74 = arith.constant 3 : index
    %254 = memref.load %arg5[%c3_74] : memref<4xf32, #tpu.memory_space<smem>>
    %255 = arith.mulf %142, %254 : f32
    %c3_75 = arith.constant 3 : index
    %256 = memref.load %arg6[%c3_75] : memref<4xf32, #tpu.memory_space<smem>>
    %257 = arith.addf %255, %256 : f32
    %c7_76 = arith.constant 7 : index
    %258 = memref.load %arg7[%c7_76] : memref<8xf32, #tpu.memory_space<smem>>
    %259 = arith.mulf %144, %258 : f32
    %260 = arith.addf %257, %259 : f32
    %c3_77 = arith.constant 3 : index
    %261 = memref.load %arg4[%c3_77] : memref<16xf32, #tpu.memory_space<smem>>
    %262 = vector.broadcast %261 : f32 to vector<1x256xf32>
    %263 = arith.mulf %154, %262 : vector<1x256xf32>
    %c7_78 = arith.constant 7 : index
    %264 = memref.load %arg4[%c7_78] : memref<16xf32, #tpu.memory_space<smem>>
    %265 = vector.broadcast %264 : f32 to vector<1x256xf32>
    %266 = arith.mulf %160, %265 : vector<1x256xf32>
    %267 = arith.addf %263, %266 : vector<1x256xf32>
    %c11_79 = arith.constant 11 : index
    %268 = memref.load %arg4[%c11_79] : memref<16xf32, #tpu.memory_space<smem>>
    %269 = vector.broadcast %268 : f32 to vector<1x256xf32>
    %270 = arith.mulf %166, %269 : vector<1x256xf32>
    %271 = arith.addf %267, %270 : vector<1x256xf32>
    %c15_80 = arith.constant 15 : index
    %272 = memref.load %arg4[%c15_80] : memref<16xf32, #tpu.memory_space<smem>>
    %273 = vector.broadcast %272 : f32 to vector<1x256xf32>
    %274 = arith.mulf %172, %273 : vector<1x256xf32>
    %275 = arith.addf %271, %274 : vector<1x256xf32>
    %276 = vector.broadcast %260 : f32 to vector<1x256xf32>
    %277 = arith.addf %275, %276 : vector<1x256xf32>
    %278 = arith.subf %148, %277 : vector<1x256xf32>
    %279 = arith.mulf %278, %278 : vector<1x256xf32>
    %280 = arith.addf %253, %279 : vector<1x256xf32>
    %281 = vector.shape_cast %280 : vector<1x256xf32> to vector<1x1x256xf32>
    %cst_81 = arith.constant dense<0.000000e+00> : vector<1xf32>
    %282 = vector.multi_reduction <add>, %281, %cst_81 [1, 2] : vector<1x1x256xf32> to vector<1xf32>
    %283 = vector.shape_cast %282 : vector<1xf32> to vector<1x1x1xf32>
    %284 = vector.extract %283[0, 0, 0] : f32 from vector<1x1x1xf32>
    %cst_82 = arith.constant 4.8828125E-4 : f32
    %285 = arith.mulf %284, %cst_82 : f32
    %c0_83 = arith.constant 0 : index
    %286 = memref.load %arg10[%c0_83] : memref<1xf32, #tpu.memory_space<smem>>
    memref.store %285, %arg10[%c0_83] : memref<1xf32, #tpu.memory_space<smem>>
    return
  }
}

</mosaic_0001>

<llo_original>
// kernel: tpu_custom_call.1
$region0: #{tpu_custom_call.1}
  #allocation0 [shape = 'u32[]', space=smem, size = 0x4, offset = 0x4, fixed_abs, tag = 'smem constant byte address 0x4 - core index']
  #allocation1 [shape = 'u32[144,128]{1,0:T(1,128)}', space=vmem, size = 0x12000, scoped, tag = 'internal scratch']
  %s0 = inlined_call_operand.hbm [shape: f32[2], index: 0, kind: input, shape index: {}]
  %s1 = inlined_call_operand.vmem [shape: f32[2], index: 1, kind: input, shape index: {}]
  %s2 = inlined_call_operand.vmem [shape: f32[2], index: 2, kind: input, shape index: {}]
  %s3 = inlined_call_operand.hbm [shape: f32[2], index: 3, kind: input, shape index: {}]
  %s4 = inlined_call_operand.hbm [shape: f32[16], index: 4, kind: input, shape index: {}]
  %s5 = inlined_call_operand.hbm [shape: f32[4], index: 5, kind: input, shape index: {}]
  %s6 = inlined_call_operand.hbm [shape: f32[4], index: 6, kind: input, shape index: {}]
  %s7 = inlined_call_operand.hbm [shape: f32[8], index: 7, kind: input, shape index: {}]
  %s8 = inlined_call_operand.vmem [shape: f32[8,256], index: 8, kind: input, shape index: {}]
  %s9 = inlined_call_operand.vmem [shape: f32[8,256], index: 9, kind: input, shape index: {}]
  %s10 = inlined_call_operand.hbm [shape: f32[1], index: 10, kind: output, shape index: {}]
  %s11 = sld [smem:[#allocation0]]
  $region82: #{tpu_custom_call.1} parent=0
    _
  %s13 = ssub.s32 1, %s11
  %s14 = scalar_select 0, %s13, %s11
  $region1: #{tpu_custom_call.1} parent=0
    #allocation2 [shape = 'u8[512]{0}', space=smem, size = 0x200, scoped, tag = 'input window, operand 0, single buffered']
    #allocation3 [shape = 's32[1]{0}', space=sflag, size = 0x4, scoped, tag = 'scoped memory for tpu_custom_call.1']
    #allocation4 [shape = 's32[1]{0}', space=sflag, size = 0x4, scoped, tag = 'scoped memory for tpu_custom_call.1']
    #allocation5 [shape = 's32[1]{0}', space=sflag, size = 0x4, scoped, tag = 'scoped memory for tpu_custom_call.1']
    #allocation6 [shape = 'u8[512]{0}', space=smem, size = 0x200, scoped, tag = 'input window, operand 1, single buffered']
    #allocation7 [shape = 'u8[512]{0}', space=smem, size = 0x200, scoped, tag = 'input window, operand 2, single buffered']
    #allocation8 [shape = 's32[1]{0}', space=sflag, size = 0x4, scoped, tag = 'scoped memory for tpu_custom_call.1']
    #allocation9 [shape = 'u8[512]{0}', space=smem, size = 0x200, scoped, tag = 'input window, operand 3, single buffered']
    #allocation10 [shape = 's32[1]{0}', space=sflag, size = 0x4, scoped, tag = 'scoped memory for tpu_custom_call.1']
    #allocation11 [shape = 'u8[512]{0}', space=smem, size = 0x200, scoped, tag = 'input window, operand 4, single buffered']
    #allocation12 [shape = 'u8[512]{0}', space=smem, size = 0x200, scoped, tag = 'input window, operand 5, single buffered']
    #allocation13 [shape = 's32[1]{0}', space=sflag, size = 0x4, scoped, tag = 'scoped memory for tpu_custom_call.1']
    #allocation14 [shape = 'u8[512]{0}', space=smem, size = 0x200, scoped, tag = 'input window, operand 6, single buffered']
    #allocation15 [shape = 'u8[512]{0}', space=smem, size = 0x200, scoped, tag = 'input window, operand 7, single buffered']
    #allocation16 [shape = 's32[1]{0}', space=sflag, size = 0x4, scoped, tag = 'scoped memory for tpu_custom_call.1']
    #allocation17 [shape = 'u8[512]{0}', space=smem, size = 0x200, scoped, tag = 'output window, operand 0, single buffered']
    %15 = vsyncpa [#allocation3], 0
    %16 = vsyncpa [#allocation5], 0
    %17 = vsyncpa [#allocation8], 0
    %18 = vsyncpa [#allocation10], 0
    %19 = vsyncpa [#allocation13], 0
    %20 = vsyncpa [#allocation16], 0
    %21 = vsyncpa [#allocation4], 0
    // Predicated region
    $region2: #{tpu_custom_call.1} parent=1 // pred_check
      _
    $region3: #{tpu_custom_call.1} parent=1 // pred_check_branch
      %23 = sbr.rel (0) target = $region5
    $region4: #{tpu_custom_call.1} parent=1 // pred_region
      %s25 = ssub.s32 16, 16
      %26 = vsyncadd [#allocation3], %s25
      %29 = dma.hbm_to_smem %s0, 16, [#allocation2], [#allocation3]
    $region5: #{tpu_custom_call.1} parent=1 // pred_fallthru
      _
    // Predicated region
    $region6: #{tpu_custom_call.1} parent=1 // pred_check
      _
    $region7: #{tpu_custom_call.1} parent=1 // pred_check_branch
      %31 = sbr.rel (0) target = $region9
    $region8: #{tpu_custom_call.1} parent=1 // pred_region
      %s33 = ssub.s32 16, 16
      %34 = vsyncadd [#allocation5], %s33
      %s36 = sshll.u32 %s1, 4
      %s37 = int_to_ptr.vmem [resolvable:$true] %s36
      %39 = dma.vmem_to_smem %s37, 16, [#allocation6], [#allocation5]
    $region9: #{tpu_custom_call.1} parent=1 // pred_fallthru
      _
    // Predicated region
    $region10: #{tpu_custom_call.1} parent=1 // pred_check
      _
    $region11: #{tpu_custom_call.1} parent=1 // pred_check_branch
      %41 = sbr.rel (0) target = $region13
    $region12: #{tpu_custom_call.1} parent=1 // pred_region
      %s43 = ssub.s32 16, 16
      %44 = vsyncadd [#allocation8], %s43
      %s46 = sshll.u32 %s2, 4
      %s47 = int_to_ptr.vmem [resolvable:$true] %s46
      %49 = dma.vmem_to_smem %s47, 16, [#allocation7], [#allocation8]
    $region13: #{tpu_custom_call.1} parent=1 // pred_fallthru
      _
    // Predicated region
    $region14: #{tpu_custom_call.1} parent=1 // pred_check
      _
    $region15: #{tpu_custom_call.1} parent=1 // pred_check_branch
      %51 = sbr.rel (0) target = $region17
    $region16: #{tpu_custom_call.1} parent=1 // pred_region
      %s53 = ssub.s32 16, 16
      %54 = vsyncadd [#allocation10], %s53
      %57 = dma.hbm_to_smem %s3, 16, [#allocation9], [#allocation10]
    $region17: #{tpu_custom_call.1} parent=1 // pred_fallthru
      _
    // Predicated region
    $region18: #{tpu_custom_call.1} parent=1 // pred_check
      _
    $region19: #{tpu_custom_call.1} parent=1 // pred_check_branch
      %59 = sbr.rel (0) target = $region21
    $region20: #{tpu_custom_call.1} parent=1 // pred_region
      %s61 = ssub.s32 16, 16
      %62 = vsyncadd [#allocation10], %s61
      %65 = dma.hbm_to_smem %s4, 16, [#allocation11], [#allocation10]
    $region21: #{tpu_custom_call.1} parent=1 // pred_fallthru
      _
    // Predicated region
    $region22: #{tpu_custom_call.1} parent=1 // pred_check
      _
    $region23: #{tpu_custom_call.1} parent=1 // pred_check_branch
      %67 = sbr.rel (0) target = $region25
    $region24: #{tpu_custom_call.1} parent=1 // pred_region
      %s69 = ssub.s32 16, 16
      %70 = vsyncadd [#allocation13], %s69
      %73 = dma.hbm_to_smem %s5, 16, [#allocation12], [#allocation13]
    $region25: #{tpu_custom_call.1} parent=1 // pred_fallthru
      _
    // Predicated region
    $region26: #{tpu_custom_call.1} parent=1 // pred_check
      _
    $region27: #{tpu_custom_call.1} parent=1 // pred_check_branch
      %75 = sbr.rel (0) target = $region29
    $region28: #{tpu_custom_call.1} parent=1 // pred_region
      %s77 = ssub.s32 16, 16
      %78 = vsyncadd [#allocation13], %s77
      %81 = dma.hbm_to_smem %s6, 16, [#allocation14], [#allocation13]
    $region29: #{tpu_custom_call.1} parent=1 // pred_fallthru
      _
    // Predicated region
    $region30: #{tpu_custom_call.1} parent=1 // pred_check
      _
    $region31: #{tpu_custom_call.1} parent=1 // pred_check_branch
      %83 = sbr.rel (0) target = $region33
    $region32: #{tpu_custom_call.1} parent=1 // pred_region
      %s85 = ssub.s32 16, 16
      %86 = vsyncadd [#allocation16], %s85
      %89 = dma.hbm_to_smem %s7, 16, [#allocation15], [#allocation16]
    $region33: #{tpu_custom_call.1} parent=1 // pred_fallthru
      _
    // Predicated region
    $region34: #{tpu_custom_call.1} parent=1 // pred_check
      _
    $region35: #{tpu_custom_call.1} parent=1 // pred_check_branch
      %91 = sbr.rel (0) target = $region37
    $region36: #{tpu_custom_call.1} parent=1 // pred_region
      _
    $region37: #{tpu_custom_call.1} parent=1 // pred_fallthru
      _
    // Predicated region
    $region38: #{tpu_custom_call.1} parent=1 // pred_check
      _
    $region39: #{tpu_custom_call.1} parent=1 // pred_check_branch
      %93 = sbr.rel (0) target = $region41
    $region40: #{tpu_custom_call.1} parent=1 // pred_region
      _
    $region41: #{tpu_custom_call.1} parent=1 // pred_fallthru
      _
    // Predicated region
    $region42: #{tpu_custom_call.1} parent=1 // pred_check
      _
    $region43: #{tpu_custom_call.1} parent=1 // pred_check_branch
      %95 = sbr.rel (0) target = $region45
    $region44: #{tpu_custom_call.1} parent=1 // pred_region
      %96 = dma.done [#allocation3], 16
    $region45: #{tpu_custom_call.1} parent=1 // pred_fallthru
      _
    // Predicated region
    $region46: #{tpu_custom_call.1} parent=1 // pred_check
      _
    $region47: #{tpu_custom_call.1} parent=1 // pred_check_branch
      %98 = sbr.rel (0) target = $region49
    $region48: #{tpu_custom_call.1} parent=1 // pred_region
      %99 = dma.done [#allocation5], 16
    $region49: #{tpu_custom_call.1} parent=1 // pred_fallthru
      _
    // Predicated region
    $region50: #{tpu_custom_call.1} parent=1 // pred_check
      _
    $region51: #{tpu_custom_call.1} parent=1 // pred_check_branch
      %101 = sbr.rel (0) target = $region53
    $region52: #{tpu_custom_call.1} parent=1 // pred_region
      %102 = dma.done [#allocation8], 16
    $region53: #{tpu_custom_call.1} parent=1 // pred_fallthru
      _
    // Predicated region
    $region54: #{tpu_custom_call.1} parent=1 // pred_check
      _
    $region55: #{tpu_custom_call.1} parent=1 // pred_check_branch
      %104 = sbr.rel (0) target = $region57
    $region56: #{tpu_custom_call.1} parent=1 // pred_region
      %105 = dma.done [#allocation10], 16
    $region57: #{tpu_custom_call.1} parent=1 // pred_fallthru
      _
    // Predicated region
    $region58: #{tpu_custom_call.1} parent=1 // pred_check
      _
    $region59: #{tpu_custom_call.1} parent=1 // pred_check_branch
      %107 = sbr.rel (0) target = $region61
    $region60: #{tpu_custom_call.1} parent=1 // pred_region
      %108 = dma.done [#allocation10], 16
    $region61: #{tpu_custom_call.1} parent=1 // pred_fallthru
      _
    // Predicated region
    $region62: #{tpu_custom_call.1} parent=1 // pred_check
      _
    $region63: #{tpu_custom_call.1} parent=1 // pred_check_branch
      %110 = sbr.rel (0) target = $region65
    $region64: #{tpu_custom_call.1} parent=1 // pred_region
      %111 = dma.done [#allocation13], 16
    $region65: #{tpu_custom_call.1} parent=1 // pred_fallthru
      _
    // Predicated region
    $region66: #{tpu_custom_call.1} parent=1 // pred_check
      _
    $region67: #{tpu_custom_call.1} parent=1 // pred_check_branch
      %113 = sbr.rel (0) target = $region69
    $region68: #{tpu_custom_call.1} parent=1 // pred_region
      %114 = dma.done [#allocation13], 16
    $region69: #{tpu_custom_call.1} parent=1 // pred_fallthru
      _
    // Predicated region
    $region70: #{tpu_custom_call.1} parent=1 // pred_check
      _
    $region71: #{tpu_custom_call.1} parent=1 // pred_check_branch
      %116 = sbr.rel (0) target = $region73
    $region72: #{tpu_custom_call.1} parent=1 // pred_region
      %117 = dma.done [#allocation16], 16
    $region73: #{tpu_custom_call.1} parent=1 // pred_fallthru
      _
    %118 = sfence
    %s119 = sld [smem:[#allocation2]]
    %s120 = sld [smem:[#allocation6]]
    %s121 = sld [smem:[#allocation7]]
    %s122 = sld [smem:[#allocation9]]
    %s123 = ssub.f32 1.0, %s122
    %v124 = vld [vmem:[%s9] ss:$8 sm:$0x3]
    %s125 = scalar_lea.vmem %s9, 1
    %v126 = vld [vmem:[%s125] ss:$8 sm:$0x3]
    %s127 = scalar_lea.vmem %s9, 2
    %v128 = vld [vmem:[%s127] ss:$8 sm:$0x3]
    %s129 = scalar_lea.vmem %s9, 3
    %v130 = vld [vmem:[%s129] ss:$8 sm:$0x3]
    %v131 = vld [vmem:[%s8] ss:$8 sm:$0x3]
    %v132 = vstv %s119
    %v133 = vmul.f32 %v132, %v131
    %v134 = vstv %s120
    %v135 = vmul.f32 %v134, %v124
    %v136 = vadd.f32 %v133, %v135
    %s137 = scalar_lea.vmem %s8, 1
    %v138 = vld [vmem:[%s137] ss:$8 sm:$0x3]
    %v139 = vmul.f32 %v132, %v138
    %v140 = vmul.f32 %v134, %v126
    %v141 = vadd.f32 %v139, %v140
    %s142 = scalar_lea.vmem %s8, 2
    %v143 = vld [vmem:[%s142] ss:$8 sm:$0x3]
    %v144 = vmul.f32 %v132, %v143
    %v145 = vmul.f32 %v134, %v128
    %v146 = vadd.f32 %v144, %v145
    %s147 = scalar_lea.vmem %s8, 3
    %v148 = vld [vmem:[%s147] ss:$8 sm:$0x3]
    %v149 = vmul.f32 %v132, %v148
    %v150 = vmul.f32 %v134, %v130
    %v151 = vadd.f32 %v149, %v150
    %s152 = sld [smem:[#allocation12]]
    %s153 = smul.f32 %s121, %s152
    %s154 = sld [smem:[#allocation14]]
    %s155 = sadd.f32 %s153, %s154
    %s156 = sld [smem:[#allocation15]]
    %s157 = smul.f32 %s123, %s156
    %s158 = sadd.f32 %s155, %s157
    %s159 = sld [smem:[#allocation11]]
    %v160 = vstv %s159
    %v161 = vmul.f32 %v136, %v160
    %s162 = sld [smem:[#allocation11 + $0x4]]
    %v163 = vstv %s162
    %v164 = vmul.f32 %v141, %v163
    %v165 = vadd.f32 %v161, %v164
    %s166 = sld [smem:[#allocation11 + $0x8]]
    %v167 = vstv %s166
    %v168 = vmul.f32 %v146, %v167
    %v169 = vadd.f32 %v165, %v168
    %s170 = sld [smem:[#allocation11 + $0xc]]
    %v171 = vstv %s170
    %v172 = vmul.f32 %v151, %v171
    %v173 = vadd.f32 %v169, %v172
    %v174 = vstv %s158
    %v175 = vadd.f32 %v173, %v174
    %v176 = vsub.f32 %v124, %v175
    %v177 = vmul.f32 %v176, %v176
    %s178 = sld [smem:[#allocation12 + $0x1]]
    %s179 = smul.f32 %s121, %s178
    %s180 = sld [smem:[#allocation14 + $0x1]]
    %s181 = sadd.f32 %s179, %s180
    %s182 = sld [smem:[#allocation15 + $0x1]]
    %s183 = smul.f32 %s123, %s182
    %s184 = sadd.f32 %s181, %s183
    %s185 = sld [smem:[#allocation11 + $0x1]]
    %v186 = vstv %s185
    %v187 = vmul.f32 %v136, %v186
    %s188 = sld [smem:[#allocation11 + $0x5]]
    %v189 = vstv %s188
    %v190 = vmul.f32 %v141, %v189
    %v191 = vadd.f32 %v187, %v190
    %s192 = sld [smem:[#allocation11 + $0x9]]
    %v193 = vstv %s192
    %v194 = vmul.f32 %v146, %v193
    %v195 = vadd.f32 %v191, %v194
    %s196 = sld [smem:[#allocation11 + $0xd]]
    %v197 = vstv %s196
    %v198 = vmul.f32 %v151, %v197
    %v199 = vadd.f32 %v195, %v198
    %v200 = vstv %s184
    %v201 = vadd.f32 %v199, %v200
    %v202 = vsub.f32 %v126, %v201
    %v203 = vmul.f32 %v202, %v202
    %v204 = vadd.f32 %v177, %v203
    %s205 = sld [smem:[#allocation12 + $0x2]]
    %s206 = smul.f32 %s121, %s205
    %s207 = sld [smem:[#allocation14 + $0x2]]
    %s208 = sadd.f32 %s206, %s207
    %s209 = sld [smem:[#allocation15 + $0x2]]
    %s210 = smul.f32 %s123, %s209
    %s211 = sadd.f32 %s208, %s210
    %s212 = sld [smem:[#allocation11 + $0x2]]
    %v213 = vstv %s212
    %v214 = vmul.f32 %v136, %v213
    %s215 = sld [smem:[#allocation11 + $0x6]]
    %v216 = vstv %s215
    %v217 = vmul.f32 %v141, %v216
    %v218 = vadd.f32 %v214, %v217
    %s219 = sld [smem:[#allocation11 + $0xa]]
    %v220 = vstv %s219
    %v221 = vmul.f32 %v146, %v220
    %v222 = vadd.f32 %v218, %v221
    %s223 = sld [smem:[#allocation11 + $0xe]]
    %v224 = vstv %s223
    %v225 = vmul.f32 %v151, %v224
    %v226 = vadd.f32 %v222, %v225
    %v227 = vstv %s211
    %v228 = vadd.f32 %v226, %v227
    %v229 = vsub.f32 %v128, %v228
    %v230 = vmul.f32 %v229, %v229
    %v231 = vadd.f32 %v204, %v230
    %s232 = sld [smem:[#allocation12 + $0x3]]
    %s233 = smul.f32 %s121, %s232
    %s234 = sld [smem:[#allocation14 + $0x3]]
    %s235 = sadd.f32 %s233, %s234
    %s236 = sld [smem:[#allocation15 + $0x3]]
    %s237 = smul.f32 %s123, %s236
    %s238 = sadd.f32 %s235, %s237
    %s239 = sld [smem:[#allocation11 + $0x3]]
    %v240 = vstv %s239
    %v241 = vmul.f32 %v136, %v240
    %s242 = sld [smem:[#allocation11 + $0x7]]
    %v243 = vstv %s242
    %v244 = vmul.f32 %v141, %v243
    %v245 = vadd.f32 %v241, %v244
    %s246 = sld [smem:[#allocation11 + $0xb]]
    %v247 = vstv %s246
    %v248 = vmul.f32 %v146, %v247
    %v249 = vadd.f32 %v245, %v248
    %s250 = sld [smem:[#allocation11 + $0xf]]
    %v251 = vstv %s250
    %v252 = vmul.f32 %v151, %v251
    %v253 = vadd.f32 %v249, %v252
    %v254 = vstv %s238
    %v255 = vadd.f32 %v253, %v254
    %v256 = vsub.f32 %v130, %v255
    %v257 = vmul.f32 %v256, %v256
    %v258 = vadd.f32 %v231, %v257
    %s259 = sld [smem:[#allocation2 + $0x1]]
    %s260 = sld [smem:[#allocation6 + $0x1]]
    %s261 = sld [smem:[#allocation7 + $0x1]]
    %s262 = sld [smem:[#allocation9 + $0x1]]
    %s263 = ssub.f32 1.0, %s262
    %s264 = scalar_lea.vmem %s9, 4
    %v265 = vld [vmem:[%s264] ss:$8 sm:$0x3]
    %s266 = scalar_lea.vmem %s9, 5
    %v267 = vld [vmem:[%s266] ss:$8 sm:$0x3]
    %s268 = scalar_lea.vmem %s9, 6
    %v269 = vld [vmem:[%s268] ss:$8 sm:$0x3]
    %s270 = scalar_lea.vmem %s9, 7
    %v271 = vld [vmem:[%s270] ss:$8 sm:$0x3]
    %s272 = scalar_lea.vmem %s8, 4
    %v273 = vld [vmem:[%s272] ss:$8 sm:$0x3]
    %v274 = vstv %s259
    %v275 = vmul.f32 %v274, %v273
    %v276 = vstv %s260
    %v277 = vmul.f32 %v276, %v265
    %v278 = vadd.f32 %v275, %v277
    %s279 = scalar_lea.vmem %s8, 5
    %v280 = vld [vmem:[%s279] ss:$8 sm:$0x3]
    %v281 = vmul.f32 %v274, %v280
    %v282 = vmul.f32 %v276, %v267
    %v283 = vadd.f32 %v281, %v282
    %s284 = scalar_lea.vmem %s8, 6
    %v285 = vld [vmem:[%s284] ss:$8 sm:$0x3]
    %v286 = vmul.f32 %v274, %v285
    %v287 = vmul.f32 %v276, %v269
    %v288 = vadd.f32 %v286, %v287
    %s289 = scalar_lea.vmem %s8, 7
    %v290 = vld [vmem:[%s289] ss:$8 sm:$0x3]
    %v291 = vmul.f32 %v274, %v290
    %v292 = vmul.f32 %v276, %v271
    %v293 = vadd.f32 %v291, %v292
    %s294 = smul.f32 %s261, %s152
    %s295 = sadd.f32 %s294, %s154
    %s296 = sld [smem:[#allocation15 + $0x4]]
    %s297 = smul.f32 %s263, %s296
    %s298 = sadd.f32 %s295, %s297
    %v299 = vmul.f32 %v278, %v160
    %v300 = vmul.f32 %v283, %v163
    %v301 = vadd.f32 %v299, %v300
    %v302 = vmul.f32 %v288, %v167
    %v303 = vadd.f32 %v301, %v302
    %v304 = vmul.f32 %v293, %v171
    %v305 = vadd.f32 %v303, %v304
    %v306 = vstv %s298
    %v307 = vadd.f32 %v305, %v306
    %v308 = vsub.f32 %v265, %v307
    %v309 = vmul.f32 %v308, %v308
    %v310 = vadd.f32 %v258, %v309
    %s311 = smul.f32 %s261, %s178
    %s312 = sadd.f32 %s311, %s180
    %s313 = sld [smem:[#allocation15 + $0x5]]
    %s314 = smul.f32 %s263, %s313
    %s315 = sadd.f32 %s312, %s314
    %v316 = vmul.f32 %v278, %v186
    %v317 = vmul.f32 %v283, %v189
    %v318 = vadd.f32 %v316, %v317
    %v319 = vmul.f32 %v288, %v193
    %v320 = vadd.f32 %v318, %v319
    %v321 = vmul.f32 %v293, %v197
    %v322 = vadd.f32 %v320, %v321
    %v323 = vstv %s315
    %v324 = vadd.f32 %v322, %v323
    %v325 = vsub.f32 %v267, %v324
    %v326 = vmul.f32 %v325, %v325
    %v327 = vadd.f32 %v310, %v326
    %s328 = smul.f32 %s261, %s205
    %s329 = sadd.f32 %s328, %s207
    %s330 = sld [smem:[#allocation15 + $0x6]]
    %s331 = smul.f32 %s263, %s330
    %s332 = sadd.f32 %s329, %s331
    %v333 = vmul.f32 %v278, %v213
    %v334 = vmul.f32 %v283, %v216
    %v335 = vadd.f32 %v333, %v334
    %v336 = vmul.f32 %v288, %v220
    %v337 = vadd.f32 %v335, %v336
    %v338 = vmul.f32 %v293, %v224
    %v339 = vadd.f32 %v337, %v338
    %v340 = vstv %s332
    %v341 = vadd.f32 %v339, %v340
    %v342 = vsub.f32 %v269, %v341
    %v343 = vmul.f32 %v342, %v342
    %v344 = vadd.f32 %v327, %v343
    %s345 = smul.f32 %s261, %s232
    %s346 = sadd.f32 %s345, %s234
    %s347 = sld [smem:[#allocation15 + $0x7]]
    %s348 = smul.f32 %s263, %s347
    %s349 = sadd.f32 %s346, %s348
    %v350 = vmul.f32 %v278, %v240
    %v351 = vmul.f32 %v283, %v243
    %v352 = vadd.f32 %v350, %v351
    %v353 = vmul.f32 %v288, %v247
    %v354 = vadd.f32 %v352, %v353
    %v355 = vmul.f32 %v293, %v251
    %v356 = vadd.f32 %v354, %v355
    %v357 = vstv %s349
    %v358 = vadd.f32 %v356, %v357
    %v359 = vsub.f32 %v271, %v358
    %v360 = vmul.f32 %v359, %v359
    %v361 = vadd.f32 %v344, %v360
    %v363 = vlaneseq
    %v364 = vshrl.u32 %v363, 7
    %v365 = vsub.s32 0, %v364
    %v366 = vrot.slane %v361, %v365
    %v367 = vlaneseq
    %v368 = vshrl.u32 %v367, 7
    %v369 = vsub.s32 1, %v368
    %v370 = vrot.slane %v361, %v369
    %vm373 = vcmask 1040384
    %v374 = vsel %vm373, %v366, 0.0
    %v375 = vsel %vm373, %v370, 0.0
    %v376 = vadd.f32 %v374, %v375
    %377 = vadd.xlane.f32.xlu0 %v376
    %v378 = vpop.xlane.xlu0 %377
    %v379 = vrot.slane %v378, 4
    %v380 = vadd.f32 %v378, %v379
    %v381 = vrot.slane %v380, 2
    %v382 = vadd.f32 %v380, %v381
    %v383 = vrot.slane %v382, 1
    %v384 = vadd.f32 %v382, %v383
    %s385 = vtos %v384
    %s386 = smul.f32 %s385, 0.00048828125
    %s387 = scalar_lea.smem [#allocation17], 0
    %388 = sst [smem:[%s387]] %s386
    // Predicated region
    $region74: #{tpu_custom_call.1} parent=1 // pred_check
      _
    $region75: #{tpu_custom_call.1} parent=1 // pred_check_branch
      %390 = sbr.rel (0) target = $region77
    $region76: #{tpu_custom_call.1} parent=1 // pred_region
      %s392 = ssub.s32 16, 16
      %393 = vsyncadd [#allocation4], %s392
      %396 = dma.smem_to_hbm [#allocation17], 16, %s10, [#allocation4]
    $region77: #{tpu_custom_call.1} parent=1 // pred_fallthru
      _
    // Predicated region
    $region78: #{tpu_custom_call.1} parent=1 // pred_check
      _
    $region79: #{tpu_custom_call.1} parent=1 // pred_check_branch
      %398 = sbr.rel (0) target = $region81
    $region80: #{tpu_custom_call.1} parent=1 // pred_region
      %399 = dma.done [#allocation4], 16
    $region81: #{tpu_custom_call.1} parent=1 // pred_fallthru
      _
    %400 = sfence
    %401 = vsyncpa [#allocation3], 1
    %402 = vsyncpa [#allocation10], 1
    %403 = vsyncpa [#allocation13], 1
    %404 = vsyncpa [#allocation16], 1
    %405 = vsyncpa [#allocation4], 1
    %406 = vsyncpa [#allocation5], 1
    %407 = vsyncpa [#allocation8], 1

</llo_original>
